<compile_context>
chip_gen: v6e
topology: v6e:2x2x1
jax: 0.10.0
libtpu: 0.0.40
codegen_flags: <defaults>
</compile_context>

<pallas_src>
import functools

import jax
import jax.numpy as jnp
from jax.experimental import pallas as pl
from jax.experimental.pallas import tpu as pltpu

_LANE = 128
_SUBLANE = 8


def _round_up(x, m):
    return ((x + m - 1) // m) * m


def _cdefunc_kernel(z_ref,
                    w0, b0, w1, b1, w2, b2, w3, b3, w4, b4,
                    out_ref):
    """Fused 5-layer MLP: (linear+relu) x4, then final linear (no activation).

    Weights arrive in bf16 (MXU-native); activations are carried in f32 and
    cast to bf16 only at each dot operand boundary; accumulation is f32.
    """
    h = z_ref[...]

    h = jnp.dot(h.astype(jnp.bfloat16), w0[...],
                preferred_element_type=jnp.float32) + b0[...]
    h = jnp.maximum(h, 0.0)

    h = jnp.dot(h.astype(jnp.bfloat16), w1[...],
                preferred_element_type=jnp.float32) + b1[...]
    h = jnp.maximum(h, 0.0)

    h = jnp.dot(h.astype(jnp.bfloat16), w2[...],
                preferred_element_type=jnp.float32) + b2[...]
    h = jnp.maximum(h, 0.0)

    h = jnp.dot(h.astype(jnp.bfloat16), w3[...],
                preferred_element_type=jnp.float32) + b3[...]
    h = jnp.maximum(h, 0.0)

    y = jnp.dot(h.astype(jnp.bfloat16), w4[...],
                preferred_element_type=jnp.float32) + b4[...]
    out_ref[...] = y.astype(out_ref.dtype)


def prepare_params(params, input_channels, hidden_channels):
    """One-time parameter prep — call OUTSIDE the ODE-solve hot path.

    * Weights cast to bf16 (MXU-native operands), stored (in, out).
    * Biases reshaped to (1, out) f32 rows.
    * Final layer's columns zero-padded to a multiple of 128 so the kernel's
      output block is lane-dense (unmasked stores) for any channel config.
    Returns a flat tuple (w0, b0, ..., w4, b4).
    """
    out_dim = input_channels * hidden_channels
    out_dim_pad = _round_up(out_dim, _LANE)
    flat = []
    for i in range(5):
        w = params[f"w{i}"].astype(jnp.bfloat16)
        b = params[f"b{i}"].reshape(1, -1).astype(jnp.float32)
        if i == 4 and out_dim_pad != out_dim:
            w = jnp.pad(w, ((0, 0), (0, out_dim_pad - out_dim)))
            b = jnp.pad(b, ((0, 0), (0, out_dim_pad - out_dim)))
        flat.append(w)
        flat.append(b)
    return tuple(flat)


def _choose_tile_b(B, max_tile_b):
    """Sublane-aligned batch tile; >= 2 grid steps when B allows (v7x's two
    TensorCores), rounded down toward B to minimize padded rows."""
    full = _round_up(B, _SUBLANE)
    if B < 2 * _SUBLANE:
        return min(max_tile_b, full)
    n = max(2, pl.cdiv(B, max_tile_b))
    return min(max_tile_b, _round_up(pl.cdiv(B, n), _SUBLANE))


def cdefunc_g_forward(t, z, prepared, input_channels, hidden_channels,
                      *, max_tile_b=4096, out_dtype=jnp.float32):
    """JAX wrapper reproducing CDEFunc_g.forward(t, z).

    z: (B, hidden_channels) float32
    prepared: output of `prepare_params` (or a raw params dict).
    returns: (B, hidden_channels, input_channels) in `out_dtype`.
    `t` is unused, matching the PyTorch module.
    """
    del t
    if isinstance(prepared, dict):  # convenience; prefer prepping once outside
        prepared = prepare_params(prepared, input_channels, hidden_channels)
    flat = prepared

    B = z.shape[0]
    out_dim = input_channels * hidden_channels
    out_dim_pad = flat[8].shape[1]          # w4's (padded) column count
    hh = flat[0].shape[1]                   # hidden_hidden_channels

    tile_b = _choose_tile_b(B, max_tile_b)
    b_pad = _round_up(B, tile_b)
    z_in = jnp.pad(z, ((0, b_pad - B), (0, 0))) if b_pad != B else z
    n_tiles = b_pad // tile_b

    in_specs = [pl.BlockSpec((tile_b, hidden_channels), lambda i: (i, 0))]
    # Weights/biases: same block index every grid step -> fetched once,
    # VMEM-resident across the whole grid.
    in_specs += [pl.BlockSpec(a.shape, lambda i: (0, 0)) for a in flat]
    out_specs = pl.BlockSpec((tile_b, out_dim_pad), lambda i: (i, 0))

    out_itemsize = jnp.dtype(out_dtype).itemsize
    weight_bytes = sum(int(a.size) * a.dtype.itemsize for a in flat)
    flops = 2 * b_pad * (hidden_channels * hh + 3 * hh * hh + hh * out_dim_pad)
    bytes_accessed = (b_pad * hidden_channels * 4
                      + b_pad * out_dim_pad * out_itemsize
                      + weight_bytes)

    # Scoped-VMEM request: double-buffered z/out blocks + resident params +
    # per-layer f32/bf16 intermediates, with 2x headroom. Capped at 48 MiB so
    # it is safe on v7x (64 MiB physical) while comfortably above v5e's small
    # scoped default.
    block_bytes = (2 * tile_b * hidden_channels * 4
                   + 2 * tile_b * out_dim_pad * out_itemsize
                   + 2 * weight_bytes
                   + 6 * tile_b * max(hh, out_dim_pad) * 4)
    vmem_limit = int(min(48 << 20, max(16 << 20, 2 * block_bytes)))

    out = pl.pallas_call(
        _cdefunc_kernel,
        out_shape=jax.ShapeDtypeStruct((b_pad, out_dim_pad), out_dtype),
        grid=(n_tiles,),
        in_specs=in_specs,
        out_specs=out_specs,
        compiler_params=pltpu.CompilerParams(
            dimension_semantics=("parallel",),
            vmem_limit_bytes=vmem_limit),
        cost_estimate=pl.CostEstimate(
            flops=flops, transcendentals=0, bytes_accessed=bytes_accessed),
    )(z_in, *flat)

    out = out[:B, :out_dim]
    # z.view(z.size(0), hidden_channels, input_channels)
    return out.reshape(B, hidden_channels, input_channels)


def init_params(key, input_channels, hidden_channels, hidden_hidden_channels):
    """Deterministic init (PyTorch-Linear-style uniform bounds), weights stored
    pre-transposed as (in_features, out_features)."""
    dims = [
        (hidden_channels, hidden_hidden_channels),
        (hidden_hidden_channels, hidden_hidden_channels),
        (hidden_hidden_channels, hidden_hidden_channels),
        (hidden_hidden_channels, hidden_hidden_channels),
        (hidden_hidden_channels, input_channels * hidden_channels),
    ]
    params = {}
    for i, (fan_in, fan_out) in enumerate(dims):
        key, kw, kb = jax.random.split(key, 3)
        bound = 1.0 / (fan_in ** 0.5)
        params[f"w{i}"] = jax.random.uniform(
            kw, (fan_in, fan_out), jnp.float32, -bound, bound)
        params[f"b{i}"] = jax.random.uniform(
            kb, (fan_out,), jnp.float32, -bound, bound)
    return params


def _reference_forward_f32(z, params, input_channels, hidden_channels):
    h = z
    for i in range(4):
        h = jnp.maximum(h @ params[f"w{i}"] + params[f"b{i}"], 0.0)
    y = h @ params["w4"] + params["b4"]
    return y.reshape(z.shape[0], hidden_channels, input_channels)


def _reference_forward_bf16(z, params, input_channels, hidden_channels):
    """Matches the kernel's precision: bf16 dot operands, f32 accumulation."""
    h = z
    for i in range(4):
        h = jnp.dot(h.astype(jnp.bfloat16),
                    params[f"w{i}"].astype(jnp.bfloat16),
                    preferred_element_type=jnp.float32) + params[f"b{i}"]
        h = jnp.maximum(h, 0.0)
    y = jnp.dot(h.astype(jnp.bfloat16),
                params["w4"].astype(jnp.bfloat16),
                preferred_element_type=jnp.float32) + params["b4"]
    return y.reshape(z.shape[0], hidden_channels, input_channels)


def _run_case(key, B, input_channels, hidden_channels, hh):
    key, kz, kp = jax.random.split(key, 3)
    z = jax.random.normal(kz, (B, hidden_channels), jnp.float32)
    t = jnp.float32(0.0)  # unused, mirrors the PyTorch signature
    params = init_params(kp, input_channels, hidden_channels, hh)

    # Prep once (hoisted out of the hot path), jit the forward so the
    # surrounding pad/slice/reshape fuse with the kernel call.
    prepared = prepare_params(params, input_channels, hidden_channels)
    fwd = jax.jit(functools.partial(cdefunc_g_forward,
                                    input_channels=input_channels,
                                    hidden_channels=hidden_channels))
    out = jax.block_until_ready(fwd(t, z, prepared))

    assert out.shape == (B, hidden_channels, input_channels)
    assert out.dtype == jnp.float32

    # Tight check against a precision-matched (bf16 operands, f32 accum) ref.
    ref_bf16 = _reference_forward_bf16(z, params, input_channels,
                                       hidden_channels)
    assert jnp.allclose(out, ref_bf16, atol=2e-3, rtol=2e-3)

    # Loose sanity check against the pure-f32 reference semantics.
    ref_f32 = _reference_forward_f32(z, params, input_channels,
                                     hidden_channels)
    assert jnp.allclose(out, ref_f32, atol=5e-2, rtol=5e-2)
    return key


if __name__ == "__main__":
    key = jax.random.PRNGKey(0)

    # Case 1: module's natural small config (out_dim = 128, lane-dense as-is,
    # single grid tile).
    key = _run_case(key, B=8, input_channels=4, hidden_channels=32, hh=32)

    # Case 2: exercises the generic paths — out_dim = 96 (lane-padded to 128),
    # batch padded, and a 2-step grid (both v7x TensorCores get work).
    key = _run_case(key, B=20, input_channels=3, hidden_channels=32, hh=48)

    print("KERNEL_OK")
</pallas_src>

<mosaic_0001>
module attributes {stable_mosaic.version = 11 : i64} {
  func.func @_cdefunc_kernel(%arg0: i32, %arg1: memref<8x32xf32, #tpu.memory_space<vmem>>, %arg2: memref<32x32xbf16, #tpu.memory_space<vmem>>, %arg3: memref<1x32xf32, #tpu.memory_space<vmem>>, %arg4: memref<32x32xbf16, #tpu.memory_space<vmem>>, %arg5: memref<1x32xf32, #tpu.memory_space<vmem>>, %arg6: memref<32x32xbf16, #tpu.memory_space<vmem>>, %arg7: memref<1x32xf32, #tpu.memory_space<vmem>>, %arg8: memref<32x32xbf16, #tpu.memory_space<vmem>>, %arg9: memref<1x32xf32, #tpu.memory_space<vmem>>, %arg10: memref<32x128xbf16, #tpu.memory_space<vmem>>, %arg11: memref<1x128xf32, #tpu.memory_space<vmem>>, %arg12: memref<8x128xf32, #tpu.memory_space<vmem>>) attributes {dimension_semantics = [#tpu.dimension_semantics<parallel>], iteration_bounds = array<i64: 1>, scalar_prefetch = 0 : i64, scratch_operands = 0 : i64, tpu.core_type = #tpu.core_type<tc>, window_params = [{transform_indices = @transform_0, window_bounds = array<i64: 8, 32>}, {pipeline_mode = #tpu.pipeline_mode<synchronous>, transform_indices = @transform_1, window_bounds = array<i64: 32, 32>}, {pipeline_mode = #tpu.pipeline_mode<synchronous>, transform_indices = @transform_2, window_bounds = array<i64: 1, 32>}, {pipeline_mode = #tpu.pipeline_mode<synchronous>, transform_indices = @transform_3, window_bounds = array<i64: 32, 32>}, {pipeline_mode = #tpu.pipeline_mode<synchronous>, transform_indices = @transform_4, window_bounds = array<i64: 1, 32>}, {pipeline_mode = #tpu.pipeline_mode<synchronous>, transform_indices = @transform_5, window_bounds = array<i64: 32, 32>}, {pipeline_mode = #tpu.pipeline_mode<synchronous>, transform_indices = @transform_6, window_bounds = array<i64: 1, 32>}, {pipeline_mode = #tpu.pipeline_mode<synchronous>, transform_indices = @transform_7, window_bounds = array<i64: 32, 32>}, {pipeline_mode = #tpu.pipeline_mode<synchronous>, transform_indices = @transform_8, window_bounds = array<i64: 1, 32>}, {pipeline_mode = #tpu.pipeline_mode<synchronous>, transform_indices = @transform_9, window_bounds = array<i64: 32, 128>}, {pipeline_mode = #tpu.pipeline_mode<synchronous>, transform_indices = @transform_10, window_bounds = array<i64: 1, 128>}, {transform_indices = @transform_11, window_bounds = array<i64: 8, 128>}]} {
    %c0 = arith.constant 0 : index
    %c0_0 = arith.constant 0 : index
    %0 = vector.load %arg1[%c0, %c0_0] : memref<8x32xf32, #tpu.memory_space<vmem>>, vector<8x32xf32>
    %1 = arith.truncf %0 : vector<8x32xf32> to vector<8x32xbf16>
    %c0_1 = arith.constant 0 : index
    %c0_2 = arith.constant 0 : index
    %2 = vector.load %arg2[%c0_1, %c0_2] : memref<32x32xbf16, #tpu.memory_space<vmem>>, vector<32x32xbf16>
    %cst = arith.constant dense<0.000000e+00> : vector<8x32xf32>
    %3 = tpu.matmul %1, %2, %cst {dimension_numbers = #tpu.dot_dimension_numbers<[1], [0], [0], [1], [0, 0, 1, 1], [], []>} : vector<8x32xbf16>, vector<32x32xbf16>, vector<8x32xf32> -> vector<8x32xf32>
    %c0_3 = arith.constant 0 : index
    %c0_4 = arith.constant 0 : index
    %4 = vector.load %arg3[%c0_3, %c0_4] : memref<1x32xf32, #tpu.memory_space<vmem>>, vector<1x32xf32>
    %5 = vector.broadcast %4 : vector<1x32xf32> to vector<8x32xf32>
    %6 = arith.addf %3, %5 : vector<8x32xf32>
    %cst_5 = arith.constant 0.000000e+00 : f32
    %7 = vector.broadcast %cst_5 : f32 to vector<8x32xf32>
    %8 = arith.maximumf %6, %7 : vector<8x32xf32>
    %9 = arith.truncf %8 : vector<8x32xf32> to vector<8x32xbf16>
    %c0_6 = arith.constant 0 : index
    %c0_7 = arith.constant 0 : index
    %10 = vector.load %arg4[%c0_6, %c0_7] : memref<32x32xbf16, #tpu.memory_space<vmem>>, vector<32x32xbf16>
    %cst_8 = arith.constant dense<0.000000e+00> : vector<8x32xf32>
    %11 = tpu.matmul %9, %10, %cst_8 {dimension_numbers = #tpu.dot_dimension_numbers<[1], [0], [0], [1], [0, 0, 1, 1], [], []>} : vector<8x32xbf16>, vector<32x32xbf16>, vector<8x32xf32> -> vector<8x32xf32>
    %c0_9 = arith.constant 0 : index
    %c0_10 = arith.constant 0 : index
    %12 = vector.load %arg5[%c0_9, %c0_10] : memref<1x32xf32, #tpu.memory_space<vmem>>, vector<1x32xf32>
    %13 = vector.broadcast %12 : vector<1x32xf32> to vector<8x32xf32>
    %14 = arith.addf %11, %13 : vector<8x32xf32>
    %cst_11 = arith.constant 0.000000e+00 : f32
    %15 = vector.broadcast %cst_11 : f32 to vector<8x32xf32>
    %16 = arith.maximumf %14, %15 : vector<8x32xf32>
    %17 = arith.truncf %16 : vector<8x32xf32> to vector<8x32xbf16>
    %c0_12 = arith.constant 0 : index
    %c0_13 = arith.constant 0 : index
    %18 = vector.load %arg6[%c0_12, %c0_13] : memref<32x32xbf16, #tpu.memory_space<vmem>>, vector<32x32xbf16>
    %cst_14 = arith.constant dense<0.000000e+00> : vector<8x32xf32>
    %19 = tpu.matmul %17, %18, %cst_14 {dimension_numbers = #tpu.dot_dimension_numbers<[1], [0], [0], [1], [0, 0, 1, 1], [], []>} : vector<8x32xbf16>, vector<32x32xbf16>, vector<8x32xf32> -> vector<8x32xf32>
    %c0_15 = arith.constant 0 : index
    %c0_16 = arith.constant 0 : index
    %20 = vector.load %arg7[%c0_15, %c0_16] : memref<1x32xf32, #tpu.memory_space<vmem>>, vector<1x32xf32>
    %21 = vector.broadcast %20 : vector<1x32xf32> to vector<8x32xf32>
    %22 = arith.addf %19, %21 : vector<8x32xf32>
    %cst_17 = arith.constant 0.000000e+00 : f32
    %23 = vector.broadcast %cst_17 : f32 to vector<8x32xf32>
    %24 = arith.maximumf %22, %23 : vector<8x32xf32>
    %25 = arith.truncf %24 : vector<8x32xf32> to vector<8x32xbf16>
    %c0_18 = arith.constant 0 : index
    %c0_19 = arith.constant 0 : index
    %26 = vector.load %arg8[%c0_18, %c0_19] : memref<32x32xbf16, #tpu.memory_space<vmem>>, vector<32x32xbf16>
    %cst_20 = arith.constant dense<0.000000e+00> : vector<8x32xf32>
    %27 = tpu.matmul %25, %26, %cst_20 {dimension_numbers = #tpu.dot_dimension_numbers<[1], [0], [0], [1], [0, 0, 1, 1], [], []>} : vector<8x32xbf16>, vector<32x32xbf16>, vector<8x32xf32> -> vector<8x32xf32>
    %c0_21 = arith.constant 0 : index
    %c0_22 = arith.constant 0 : index
    %28 = vector.load %arg9[%c0_21, %c0_22] : memref<1x32xf32, #tpu.memory_space<vmem>>, vector<1x32xf32>
    %29 = vector.broadcast %28 : vector<1x32xf32> to vector<8x32xf32>
    %30 = arith.addf %27, %29 : vector<8x32xf32>
    %cst_23 = arith.constant 0.000000e+00 : f32
    %31 = vector.broadcast %cst_23 : f32 to vector<8x32xf32>
    %32 = arith.maximumf %30, %31 : vector<8x32xf32>
    %33 = arith.truncf %32 : vector<8x32xf32> to vector<8x32xbf16>
    %c0_24 = arith.constant 0 : index
    %c0_25 = arith.constant 0 : index
    %34 = vector.load %arg10[%c0_24, %c0_25] : memref<32x128xbf16, #tpu.memory_space<vmem>>, vector<32x128xbf16>
    %cst_26 = arith.constant dense<0.000000e+00> : vector<8x128xf32>
    %35 = tpu.matmul %33, %34, %cst_26 {dimension_numbers = #tpu.dot_dimension_numbers<[1], [0], [0], [1], [0, 0, 1, 1], [], []>} : vector<8x32xbf16>, vector<32x128xbf16>, vector<8x128xf32> -> vector<8x128xf32>
    %c0_27 = arith.constant 0 : index
    %c0_28 = arith.constant 0 : index
    %36 = vector.load %arg11[%c0_27, %c0_28] : memref<1x128xf32, #tpu.memory_space<vmem>>, vector<1x128xf32>
    %37 = vector.broadcast %36 : vector<1x128xf32> to vector<8x128xf32>
    %38 = arith.addf %35, %37 : vector<8x128xf32>
    %c0_29 = arith.constant 0 : index
    %c0_30 = arith.constant 0 : index
    %39 = vector.load %arg12[%c0_29, %c0_30] : memref<8x128xf32, #tpu.memory_space<vmem>>, vector<8x128xf32>
    tpu.vector_store %arg12[%c0_29, %c0_30], %38 {strides = array<i32>} : memref<8x128xf32, #tpu.memory_space<vmem>>, vector<8x128xf32>,
    return
  }
  func.func @transform_0(%arg0: i32) -> (i32, i32) {
    %c0_i32 = arith.constant 0 : i32
    %c0_i32_0 = arith.constant 0 : i32
    return %arg0, %c0_i32 : i32, i32
  }
  func.func @transform_1(%arg0: i32) -> (i32, i32) {
    %c0_i32 = arith.constant 0 : i32
    %c0_i32_0 = arith.constant 0 : i32
    %c0_i32_1 = arith.constant 0 : i32
    return %c0_i32, %c0_i32_0 : i32, i32
  }
  func.func @transform_2(%arg0: i32) -> (i32, i32) {
    %c0_i32 = arith.constant 0 : i32
    %c0_i32_0 = arith.constant 0 : i32
    %c0_i32_1 = arith.constant 0 : i32
    return %c0_i32, %c0_i32_0 : i32, i32
  }
  func.func @transform_3(%arg0: i32) -> (i32, i32) {
    %c0_i32 = arith.constant 0 : i32
    %c0_i32_0 = arith.constant 0 : i32
    %c0_i32_1 = arith.constant 0 : i32
    return %c0_i32, %c0_i32_0 : i32, i32
  }
  func.func @transform_4(%arg0: i32) -> (i32, i32) {
    %c0_i32 = arith.constant 0 : i32
    %c0_i32_0 = arith.constant 0 : i32
    %c0_i32_1 = arith.constant 0 : i32
    return %c0_i32, %c0_i32_0 : i32, i32
  }
  func.func @transform_5(%arg0: i32) -> (i32, i32) {
    %c0_i32 = arith.constant 0 : i32
    %c0_i32_0 = arith.constant 0 : i32
    %c0_i32_1 = arith.constant 0 : i32
    return %c0_i32, %c0_i32_0 : i32, i32
  }
  func.func @transform_6(%arg0: i32) -> (i32, i32) {
    %c0_i32 = arith.constant 0 : i32
    %c0_i32_0 = arith.constant 0 : i32
    %c0_i32_1 = arith.constant 0 : i32
    return %c0_i32, %c0_i32_0 : i32, i32
  }
  func.func @transform_7(%arg0: i32) -> (i32, i32) {
    %c0_i32 = arith.constant 0 : i32
    %c0_i32_0 = arith.constant 0 : i32
    %c0_i32_1 = arith.constant 0 : i32
    return %c0_i32, %c0_i32_0 : i32, i32
  }
  func.func @transform_8(%arg0: i32) -> (i32, i32) {
    %c0_i32 = arith.constant 0 : i32
    %c0_i32_0 = arith.constant 0 : i32
    %c0_i32_1 = arith.constant 0 : i32
    return %c0_i32, %c0_i32_0 : i32, i32
  }
  func.func @transform_9(%arg0: i32) -> (i32, i32) {
    %c0_i32 = arith.constant 0 : i32
    %c0_i32_0 = arith.constant 0 : i32
    %c0_i32_1 = arith.constant 0 : i32
    return %c0_i32, %c0_i32_0 : i32, i32
  }
  func.func @transform_10(%arg0: i32) -> (i32, i32) {
    %c0_i32 = arith.constant 0 : i32
    %c0_i32_0 = arith.constant 0 : i32
    %c0_i32_1 = arith.constant 0 : i32
    return %c0_i32, %c0_i32_0 : i32, i32
  }
  func.func @transform_11(%arg0: i32) -> (i32, i32) {
    %c0_i32 = arith.constant 0 : i32
    %c0_i32_0 = arith.constant 0 : i32
    return %arg0, %c0_i32 : i32, i32
  }
}

</mosaic_0001>

<llo_original>
// kernel: cdefunc_g_forward.1
$region0: #{cdefunc_g_forward.1}
  #allocation0 [shape = 'u32[]', space=smem, size = 0x4, offset = 0x4, fixed_abs, tag = 'smem constant byte address 0x4 - core index']
  #allocation1 [shape = 'u32[144,128]{1,0:T(1,128)}', space=vmem, size = 0x12000, scoped, tag = 'internal scratch']
  %s0 = inlined_call_operand.hbm [shape: f32[8,32], index: 0, kind: input, shape index: {}]
  %s1 = inlined_call_operand.hbm [shape: bf16[32,32], index: 1, kind: input, shape index: {}]
  %s2 = inlined_call_operand.hbm [shape: f32[1,32], index: 2, kind: input, shape index: {}]
  %s3 = inlined_call_operand.hbm [shape: bf16[32,32], index: 3, kind: input, shape index: {}]
  %s4 = inlined_call_operand.hbm [shape: f32[1,32], index: 4, kind: input, shape index: {}]
  %s5 = inlined_call_operand.hbm [shape: bf16[32,32], index: 5, kind: input, shape index: {}]
  %s6 = inlined_call_operand.hbm [shape: f32[1,32], index: 6, kind: input, shape index: {}]
  %s7 = inlined_call_operand.hbm [shape: bf16[32,32], index: 7, kind: input, shape index: {}]
  %s8 = inlined_call_operand.hbm [shape: f32[1,32], index: 8, kind: input, shape index: {}]
  %s9 = inlined_call_operand.vmem [shape: bf16[32,128], index: 9, kind: input, shape index: {}]
  %s10 = inlined_call_operand.vmem [shape: f32[1,128], index: 10, kind: input, shape index: {}]
  %s11 = inlined_call_operand.vmem [shape: f32[8,128], index: 11, kind: output, shape index: {}]
  %s12 = sld [smem:[#allocation0]]
  $region90: #{cdefunc_g_forward.1} parent=0
    _
  %s14 = ssub.s32 1, %s12
  %s15 = scalar_select 0, %s14, %s12
  $region1: #{cdefunc_g_forward.1} parent=0
    #allocation2 [shape = 'u8[4096]{0}', space=vmem, size = 0x1000, scoped, tag = 'input window, operand 0, single buffered']
    #allocation3 [shape = 's32[1]{0}', space=sflag, size = 0x4, scoped, tag = 'scoped memory for cdefunc_g_forward.1']
    #allocation4 [shape = 'u8[8192]{0}', space=vmem, size = 0x2000, scoped, tag = 'input window, operand 1, single buffered']
    #allocation5 [shape = 's32[1]{0}', space=sflag, size = 0x4, scoped, tag = 'scoped memory for cdefunc_g_forward.1']
    #allocation6 [shape = 'u8[512]{0}', space=vmem, size = 0x400, scoped, tag = 'input window, operand 2, single buffered']
    #allocation7 [shape = 'u8[8192]{0}', space=vmem, size = 0x2000, scoped, tag = 'input window, operand 3, single buffered']
    #allocation8 [shape = 's32[1]{0}', space=sflag, size = 0x4, scoped, tag = 'scoped memory for cdefunc_g_forward.1']
    #allocation9 [shape = 'u8[512]{0}', space=vmem, size = 0x400, scoped, tag = 'input window, operand 4, single buffered']
    #allocation10 [shape = 'u8[8192]{0}', space=vmem, size = 0x2000, scoped, tag = 'input window, operand 5, single buffered']
    #allocation11 [shape = 's32[1]{0}', space=sflag, size = 0x4, scoped, tag = 'scoped memory for cdefunc_g_forward.1']
    #allocation12 [shape = 'u8[512]{0}', space=vmem, size = 0x400, scoped, tag = 'input window, operand 6, single buffered']
    #allocation13 [shape = 'u8[8192]{0}', space=vmem, size = 0x2000, scoped, tag = 'input window, operand 7, single buffered']
    #allocation14 [shape = 's32[1]{0}', space=sflag, size = 0x4, scoped, tag = 'scoped memory for cdefunc_g_forward.1']
    #allocation15 [shape = 'u8[512]{0}', space=vmem, size = 0x400, scoped, tag = 'input window, operand 8, single buffered']
    %16 = vsyncpa [#allocation3], 0
    %17 = vsyncpa [#allocation5], 0
    %18 = vsyncpa [#allocation8], 0
    %19 = vsyncpa [#allocation11], 0
    %20 = vsyncpa [#allocation14], 0
    // Predicated region
    $region2: #{cdefunc_g_forward.1} parent=1 // pred_check
      _
    $region3: #{cdefunc_g_forward.1} parent=1 // pred_check_branch
      %22 = sbr.rel (0) target = $region5
    $region4: #{cdefunc_g_forward.1} parent=1 // pred_region
      %s24 = ssub.s32 128, 128
      %25 = vsyncadd [#allocation3], %s24
      %s27 = sshll.u32 [#allocation2], 4
      %s28 = int_to_ptr.vmem [resolvable:$true] %s27
      %30 = dma.hbm_to_vmem [thread:$0]  %s0, 128, %s28, [#allocation3]
    $region5: #{cdefunc_g_forward.1} parent=1 // pred_fallthru
      _
    // Predicated region
    $region6: #{cdefunc_g_forward.1} parent=1 // pred_check
      _
    $region7: #{cdefunc_g_forward.1} parent=1 // pred_check_branch
      %32 = sbr.rel (0) target = $region9
    $region8: #{cdefunc_g_forward.1} parent=1 // pred_region
      %s34 = ssub.s32 256, 256
      %35 = vsyncadd [#allocation5], %s34
      %s36 = sshll.u32 [#allocation4], 4
      %s37 = int_to_ptr.vmem [resolvable:$true] %s36
      %42 = dma.hbm_to_vmem [thread:$0]  %s1, 256, %s37, [#allocation5], 64, 64, 4
    $region9: #{cdefunc_g_forward.1} parent=1 // pred_fallthru
      _
    // Predicated region
    $region10: #{cdefunc_g_forward.1} parent=1 // pred_check
      _
    $region11: #{cdefunc_g_forward.1} parent=1 // pred_check_branch
      %44 = sbr.rel (0) target = $region13
    $region12: #{cdefunc_g_forward.1} parent=1 // pred_region
      %s46 = ssub.s32 16, 16
      %47 = vsyncadd [#allocation5], %s46
      %s49 = sshll.u32 [#allocation6], 4
      %s50 = int_to_ptr.vmem [resolvable:$true] %s49
      %52 = dma.hbm_to_vmem [thread:$0]  %s2, 16, %s50, [#allocation5]
    $region13: #{cdefunc_g_forward.1} parent=1 // pred_fallthru
      _
    // Predicated region
    $region14: #{cdefunc_g_forward.1} parent=1 // pred_check
      _
    $region15: #{cdefunc_g_forward.1} parent=1 // pred_check_branch
      %54 = sbr.rel (0) target = $region17
    $region16: #{cdefunc_g_forward.1} parent=1 // pred_region
      %s56 = ssub.s32 256, 256
      %57 = vsyncadd [#allocation8], %s56
      %s58 = sshll.u32 [#allocation7], 4
      %s59 = int_to_ptr.vmem [resolvable:$true] %s58
      %64 = dma.hbm_to_vmem [thread:$0]  %s3, 256, %s59, [#allocation8], 64, 64, 4
    $region17: #{cdefunc_g_forward.1} parent=1 // pred_fallthru
      _
    // Predicated region
    $region18: #{cdefunc_g_forward.1} parent=1 // pred_check
      _
    $region19: #{cdefunc_g_forward.1} parent=1 // pred_check_branch
      %66 = sbr.rel (0) target = $region21
    $region20: #{cdefunc_g_forward.1} parent=1 // pred_region
      %s68 = ssub.s32 16, 16
      %69 = vsyncadd [#allocation8], %s68
      %s71 = sshll.u32 [#allocation9], 4
      %s72 = int_to_ptr.vmem [resolvable:$true] %s71
      %74 = dma.hbm_to_vmem [thread:$0]  %s4, 16, %s72, [#allocation8]
    $region21: #{cdefunc_g_forward.1} parent=1 // pred_fallthru
      _
    // Predicated region
    $region22: #{cdefunc_g_forward.1} parent=1 // pred_check
      _
    $region23: #{cdefunc_g_forward.1} parent=1 // pred_check_branch
      %76 = sbr.rel (0) target = $region25
    $region24: #{cdefunc_g_forward.1} parent=1 // pred_region
      %s78 = ssub.s32 256, 256
      %79 = vsyncadd [#allocation11], %s78
      %s80 = sshll.u32 [#allocation10], 4
      %s81 = int_to_ptr.vmem [resolvable:$true] %s80
      %86 = dma.hbm_to_vmem [thread:$0]  %s5, 256, %s81, [#allocation11], 64, 64, 4
    $region25: #{cdefunc_g_forward.1} parent=1 // pred_fallthru
      _
    // Predicated region
    $region26: #{cdefunc_g_forward.1} parent=1 // pred_check
      _
    $region27: #{cdefunc_g_forward.1} parent=1 // pred_check_branch
      %88 = sbr.rel (0) target = $region29
    $region28: #{cdefunc_g_forward.1} parent=1 // pred_region
      %s90 = ssub.s32 16, 16
      %91 = vsyncadd [#allocation11], %s90
      %s93 = sshll.u32 [#allocation12], 4
      %s94 = int_to_ptr.vmem [resolvable:$true] %s93
      %96 = dma.hbm_to_vmem [thread:$0]  %s6, 16, %s94, [#allocation11]
    $region29: #{cdefunc_g_forward.1} parent=1 // pred_fallthru
      _
    // Predicated region
    $region30: #{cdefunc_g_forward.1} parent=1 // pred_check
      _
    $region31: #{cdefunc_g_forward.1} parent=1 // pred_check_branch
      %98 = sbr.rel (0) target = $region33
    $region32: #{cdefunc_g_forward.1} parent=1 // pred_region
      %s100 = ssub.s32 256, 256
      %101 = vsyncadd [#allocation14], %s100
      %s102 = sshll.u32 [#allocation13], 4
      %s103 = int_to_ptr.vmem [resolvable:$true] %s102
      %108 = dma.hbm_to_vmem [thread:$0]  %s7, 256, %s103, [#allocation14], 64, 64, 4
    $region33: #{cdefunc_g_forward.1} parent=1 // pred_fallthru
      _
    // Predicated region
    $region34: #{cdefunc_g_forward.1} parent=1 // pred_check
      _
    $region35: #{cdefunc_g_forward.1} parent=1 // pred_check_branch
      %110 = sbr.rel (0) target = $region37
    $region36: #{cdefunc_g_forward.1} parent=1 // pred_region
      %s112 = ssub.s32 16, 16
      %113 = vsyncadd [#allocation14], %s112
      %s115 = sshll.u32 [#allocation15], 4
      %s116 = int_to_ptr.vmem [resolvable:$true] %s115
      %118 = dma.hbm_to_vmem [thread:$0]  %s8, 16, %s116, [#allocation14]
    $region37: #{cdefunc_g_forward.1} parent=1 // pred_fallthru
      _
    // Predicated region
    $region38: #{cdefunc_g_forward.1} parent=1 // pred_check
      _
    $region39: #{cdefunc_g_forward.1} parent=1 // pred_check_branch
      %120 = sbr.rel (0) target = $region41
    $region40: #{cdefunc_g_forward.1} parent=1 // pred_region
      _
    $region41: #{cdefunc_g_forward.1} parent=1 // pred_fallthru
      _
    // Predicated region
    $region42: #{cdefunc_g_forward.1} parent=1 // pred_check
      _
    $region43: #{cdefunc_g_forward.1} parent=1 // pred_check_branch
      %122 = sbr.rel (0) target = $region45
    $region44: #{cdefunc_g_forward.1} parent=1 // pred_region
      _
    $region45: #{cdefunc_g_forward.1} parent=1 // pred_fallthru
      _
    // Predicated region
    $region46: #{cdefunc_g_forward.1} parent=1 // pred_check
      _
    $region47: #{cdefunc_g_forward.1} parent=1 // pred_check_branch
      %124 = sbr.rel (0) target = $region49
    $region48: #{cdefunc_g_forward.1} parent=1 // pred_region
      %125 = dma.done [#allocation3], 128
    $region49: #{cdefunc_g_forward.1} parent=1 // pred_fallthru
      _
    // Predicated region
    $region50: #{cdefunc_g_forward.1} parent=1 // pred_check
      _
    $region51: #{cdefunc_g_forward.1} parent=1 // pred_check_branch
      %127 = sbr.rel (0) target = $region53
    $region52: #{cdefunc_g_forward.1} parent=1 // pred_region
      %128 = dma.done [#allocation5], 256
    $region53: #{cdefunc_g_forward.1} parent=1 // pred_fallthru
      _
    // Predicated region
    $region54: #{cdefunc_g_forward.1} parent=1 // pred_check
      _
    $region55: #{cdefunc_g_forward.1} parent=1 // pred_check_branch
      %130 = sbr.rel (0) target = $region57
    $region56: #{cdefunc_g_forward.1} parent=1 // pred_region
      %131 = dma.done [#allocation5], 16
    $region57: #{cdefunc_g_forward.1} parent=1 // pred_fallthru
      _
    // Predicated region
    $region58: #{cdefunc_g_forward.1} parent=1 // pred_check
      _
    $region59: #{cdefunc_g_forward.1} parent=1 // pred_check_branch
      %133 = sbr.rel (0) target = $region61
    $region60: #{cdefunc_g_forward.1} parent=1 // pred_region
      %134 = dma.done [#allocation8], 256
    $region61: #{cdefunc_g_forward.1} parent=1 // pred_fallthru
      _
    // Predicated region
    $region62: #{cdefunc_g_forward.1} parent=1 // pred_check
      _
    $region63: #{cdefunc_g_forward.1} parent=1 // pred_check_branch
      %136 = sbr.rel (0) target = $region65
    $region64: #{cdefunc_g_forward.1} parent=1 // pred_region
      %137 = dma.done [#allocation8], 16
    $region65: #{cdefunc_g_forward.1} parent=1 // pred_fallthru
      _
    // Predicated region
    $region66: #{cdefunc_g_forward.1} parent=1 // pred_check
      _
    $region67: #{cdefunc_g_forward.1} parent=1 // pred_check_branch
      %139 = sbr.rel (0) target = $region69
    $region68: #{cdefunc_g_forward.1} parent=1 // pred_region
      %140 = dma.done [#allocation11], 256
    $region69: #{cdefunc_g_forward.1} parent=1 // pred_fallthru
      _
    // Predicated region
    $region70: #{cdefunc_g_forward.1} parent=1 // pred_check
      _
    $region71: #{cdefunc_g_forward.1} parent=1 // pred_check_branch
      %142 = sbr.rel (0) target = $region73
    $region72: #{cdefunc_g_forward.1} parent=1 // pred_region
      %143 = dma.done [#allocation11], 16
    $region73: #{cdefunc_g_forward.1} parent=1 // pred_fallthru
      _
    // Predicated region
    $region74: #{cdefunc_g_forward.1} parent=1 // pred_check
      _
    $region75: #{cdefunc_g_forward.1} parent=1 // pred_check_branch
      %145 = sbr.rel (0) target = $region77
    $region76: #{cdefunc_g_forward.1} parent=1 // pred_region
      %146 = dma.done [#allocation14], 256
    $region77: #{cdefunc_g_forward.1} parent=1 // pred_fallthru
      _
    // Predicated region
    $region78: #{cdefunc_g_forward.1} parent=1 // pred_check
      _
    $region79: #{cdefunc_g_forward.1} parent=1 // pred_check_branch
      %148 = sbr.rel (0) target = $region81
    $region80: #{cdefunc_g_forward.1} parent=1 // pred_region
      %149 = dma.done [#allocation14], 16
    $region81: #{cdefunc_g_forward.1} parent=1 // pred_fallthru
      _
    %v151 = vld [vmem:[#allocation2] sm:$0xff]
    %v152 = vpack.c.bf16 %v151, %v151
    %v153 = vld [vmem:[#allocation4] sm:$0xf]
    %v154 = vld [vmem:[#allocation4 + $0x4] sm:$0xf]
    %v155 = vld [vmem:[#allocation4 + $0x8] sm:$0xf]
    %v156 = vld [vmem:[#allocation4 + $0xc] sm:$0xf]
    %v157 = vld [vmem:[#allocation6] sm:$0x1]
    %v159 = vlaneseq
    %v160 = vshrl.u32 %v159, 7
    %v161 = vsub.s32 0, %v160
    %v162 = vrot.slane %v157, %v161
    %v168 = vunpack.c.l.b16 %v153
    %v169 = vunpack.c.l.b16 %v154
    %v170 = vunpack.c.l.b16 %v155
    %v171 = vunpack.c.l.b16 %v156
    %v172 = vpack.c.b16 %v169, %v168
    %v173 = vpack.c.b16 %v171, %v170
    %vm176 = vcmask 261120
    %v178 = vsel %vm176, %v152, 0
    %180 = vmatprep.subr.bf16.mxu0 0
    %181 = vmatpush1.bf16.msra.mxu0 0
    %182 = vmatprep.subr.bf16.mxu0 0
    %183 = vmatpush1.bf16.msra.mxu0 0
    %184 = vmatprep.subr.bf16.mxu0 0
    %185 = vmatpush1.bf16.msra.mxu0 0
    %186 = vmatprep.subr.bf16.mxu0 0
    %187 = vmatpush1.bf16.msra.mxu0 0
    %188 = vmatprep.subr.bf16.mxu0 0
    %189 = vmatpush1.bf16.msra.mxu0 0
    %190 = vmatprep.subr.bf16.mxu0 0
    %191 = vmatpush1.bf16.msra.mxu0 0
    %192 = vmatprep.subr.bf16.mxu0 0
    %193 = vmatpush1.bf16.msra.mxu0 %v173
    %194 = vmatprep.subr.bf16.mxu0 0
    %195 = vmatpush1.bf16.msra.mxu0 %v172
    %196 = vmatprep.subr.bf16.mxu0 0
    %197 = vmatpush2.bf16.msra.mxu0 0
    %198 = vmatprep.subr.bf16.mxu0 0
    %199 = vmatpush2.bf16.msra.mxu0 0
    %200 = vmatprep.subr.bf16.mxu0 0
    %201 = vmatpush2.bf16.msra.mxu0 0
    %202 = vmatprep.subr.bf16.mxu0 0
    %203 = vmatpush2.bf16.msra.mxu0 0
    %204 = vmatprep.subr.bf16.mxu0 0
    %205 = vmatpush2.bf16.msra.mxu0 0
    %206 = vmatprep.subr.bf16.mxu0 0
    %207 = vmatpush2.bf16.msra.mxu0 0
    %208 = vmatprep.subr.bf16.mxu0 0
    %209 = vmatpush2.bf16.msra.mxu0 0
    %210 = vmatprep.subr.bf16.mxu0 0
    %211 = vmatpush2.bf16.msra.mxu0 0
    %212 = vmatprep.mubr.bf16.mxu0 0
    %213 = vmatmul.mubr.bf16.gmra.mxu0 %v178
    %v214 = vpop.f32.mrf.mxu0
    %v215 = vadd.f32 %v162, %v214
    %v216 = vpop.f32.mrf.mxu0
    %v217 = vpop.f32.mrf.mxu0
    %v218 = vpop.f32.mrf.mxu0
    %219 = vdwg.mxu0
    %v220 = vmax.f32 %v215, 0.0
    %v221 = vpack.c.bf16 %v220, %v220
    %v222 = vld [vmem:[#allocation7] sm:$0xf]
    %v223 = vld [vmem:[#allocation7 + $0x4] sm:$0xf]
    %v224 = vld [vmem:[#allocation7 + $0x8] sm:$0xf]
    %v225 = vld [vmem:[#allocation7 + $0xc] sm:$0xf]
    %v226 = vld [vmem:[#allocation9] sm:$0x1]
    %v228 = vlaneseq
    %v229 = vshrl.u32 %v228, 7
    %v230 = vsub.s32 0, %v229
    %v231 = vrot.slane %v226, %v230
    %v237 = vunpack.c.l.b16 %v222
    %v238 = vunpack.c.l.b16 %v223
    %v239 = vunpack.c.l.b16 %v224
    %v240 = vunpack.c.l.b16 %v225
    %v241 = vpack.c.b16 %v238, %v237
    %v242 = vpack.c.b16 %v240, %v239
    %v246 = vsel %vm176, %v221, 0
    %248 = vmatprep.subr.bf16.mxu0 0
    %249 = vmatpush1.bf16.msra.mxu0 0
    %250 = vmatprep.subr.bf16.mxu0 0
    %251 = vmatpush1.bf16.msra.mxu0 0
    %252 = vmatprep.subr.bf16.mxu0 0
    %253 = vmatpush1.bf16.msra.mxu0 0
    %254 = vmatprep.subr.bf16.mxu0 0
    %255 = vmatpush1.bf16.msra.mxu0 0
    %256 = vmatprep.subr.bf16.mxu0 0
    %257 = vmatpush1.bf16.msra.mxu0 0
    %258 = vmatprep.subr.bf16.mxu0 0
    %259 = vmatpush1.bf16.msra.mxu0 0
    %260 = vmatprep.subr.bf16.mxu0 0
    %261 = vmatpush1.bf16.msra.mxu0 %v242
    %262 = vmatprep.subr.bf16.mxu0 0
    %263 = vmatpush1.bf16.msra.mxu0 %v241
    %264 = vmatprep.subr.bf16.mxu0 0
    %265 = vmatpush2.bf16.msra.mxu0 0
    %266 = vmatprep.subr.bf16.mxu0 0
    %267 = vmatpush2.bf16.msra.mxu0 0
    %268 = vmatprep.subr.bf16.mxu0 0
    %269 = vmatpush2.bf16.msra.mxu0 0
    %270 = vmatprep.subr.bf16.mxu0 0
    %271 = vmatpush2.bf16.msra.mxu0 0
    %272 = vmatprep.subr.bf16.mxu0 0
    %273 = vmatpush2.bf16.msra.mxu0 0
    %274 = vmatprep.subr.bf16.mxu0 0
    %275 = vmatpush2.bf16.msra.mxu0 0
    %276 = vmatprep.subr.bf16.mxu0 0
    %277 = vmatpush2.bf16.msra.mxu0 0
    %278 = vmatprep.subr.bf16.mxu0 0
    %279 = vmatpush2.bf16.msra.mxu0 0
    %280 = vmatprep.mubr.bf16.mxu0 0
    %281 = vmatmul.mubr.bf16.gmra.mxu0 %v246
    %v282 = vpop.f32.mrf.mxu0
    %v283 = vadd.f32 %v231, %v282
    %v284 = vpop.f32.mrf.mxu0
    %v285 = vpop.f32.mrf.mxu0
    %v286 = vpop.f32.mrf.mxu0
    %287 = vdwg.mxu0
    %v288 = vmax.f32 %v283, 0.0
    %v289 = vpack.c.bf16 %v288, %v288
    %v290 = vld [vmem:[#allocation10] sm:$0xf]
    %v291 = vld [vmem:[#allocation10 + $0x4] sm:$0xf]
    %v292 = vld [vmem:[#allocation10 + $0x8] sm:$0xf]
    %v293 = vld [vmem:[#allocation10 + $0xc] sm:$0xf]
    %v294 = vld [vmem:[#allocation12] sm:$0x1]
    %v296 = vlaneseq
    %v297 = vshrl.u32 %v296, 7
    %v298 = vsub.s32 0, %v297
    %v299 = vrot.slane %v294, %v298
    %v305 = vunpack.c.l.b16 %v290
    %v306 = vunpack.c.l.b16 %v291
    %v307 = vunpack.c.l.b16 %v292
    %v308 = vunpack.c.l.b16 %v293
    %v309 = vpack.c.b16 %v306, %v305
    %v310 = vpack.c.b16 %v308, %v307
    %v314 = vsel %vm176, %v289, 0
    %316 = vmatprep.subr.bf16.mxu0 0
    %317 = vmatpush1.bf16.msra.mxu0 0
    %318 = vmatprep.subr.bf16.mxu0 0
    %319 = vmatpush1.bf16.msra.mxu0 0
    %320 = vmatprep.subr.bf16.mxu0 0
    %321 = vmatpush1.bf16.msra.mxu0 0
    %322 = vmatprep.subr.bf16.mxu0 0
    %323 = vmatpush1.bf16.msra.mxu0 0
    %324 = vmatprep.subr.bf16.mxu0 0
    %325 = vmatpush1.bf16.msra.mxu0 0
    %326 = vmatprep.subr.bf16.mxu0 0
    %327 = vmatpush1.bf16.msra.mxu0 0
    %328 = vmatprep.subr.bf16.mxu0 0
    %329 = vmatpush1.bf16.msra.mxu0 %v310
    %330 = vmatprep.subr.bf16.mxu0 0
    %331 = vmatpush1.bf16.msra.mxu0 %v309
    %332 = vmatprep.subr.bf16.mxu0 0
    %333 = vmatpush2.bf16.msra.mxu0 0
    %334 = vmatprep.subr.bf16.mxu0 0
    %335 = vmatpush2.bf16.msra.mxu0 0
    %336 = vmatprep.subr.bf16.mxu0 0
    %337 = vmatpush2.bf16.msra.mxu0 0
    %338 = vmatprep.subr.bf16.mxu0 0
    %339 = vmatpush2.bf16.msra.mxu0 0
    %340 = vmatprep.subr.bf16.mxu0 0
    %341 = vmatpush2.bf16.msra.mxu0 0
    %342 = vmatprep.subr.bf16.mxu0 0
    %343 = vmatpush2.bf16.msra.mxu0 0
    %344 = vmatprep.subr.bf16.mxu0 0
    %345 = vmatpush2.bf16.msra.mxu0 0
    %346 = vmatprep.subr.bf16.mxu0 0
    %347 = vmatpush2.bf16.msra.mxu0 0
    %348 = vmatprep.mubr.bf16.mxu0 0
    %349 = vmatmul.mubr.bf16.gmra.mxu0 %v314
    %v350 = vpop.f32.mrf.mxu0
    %v351 = vadd.f32 %v299, %v350
    %v352 = vpop.f32.mrf.mxu0
    %v353 = vpop.f32.mrf.mxu0
    %v354 = vpop.f32.mrf.mxu0
    %355 = vdwg.mxu0
    %v356 = vmax.f32 %v351, 0.0
    %v357 = vpack.c.bf16 %v356, %v356
    %v358 = vld [vmem:[#allocation13] sm:$0xf]
    %v359 = vld [vmem:[#allocation13 + $0x4] sm:$0xf]
    %v360 = vld [vmem:[#allocation13 + $0x8] sm:$0xf]
    %v361 = vld [vmem:[#allocation13 + $0xc] sm:$0xf]
    %v362 = vld [vmem:[#allocation15] sm:$0x1]
    %v364 = vlaneseq
    %v365 = vshrl.u32 %v364, 7
    %v366 = vsub.s32 0, %v365
    %v367 = vrot.slane %v362, %v366
    %v373 = vunpack.c.l.b16 %v358
    %v374 = vunpack.c.l.b16 %v359
    %v375 = vunpack.c.l.b16 %v360
    %v376 = vunpack.c.l.b16 %v361
    %v377 = vpack.c.b16 %v374, %v373
    %v378 = vpack.c.b16 %v376, %v375
    %v382 = vsel %vm176, %v357, 0
    %384 = vmatprep.subr.bf16.mxu0 0
    %385 = vmatpush1.bf16.msra.mxu0 0
    %386 = vmatprep.subr.bf16.mxu0 0
    %387 = vmatpush1.bf16.msra.mxu0 0
    %388 = vmatprep.subr.bf16.mxu0 0
    %389 = vmatpush1.bf16.msra.mxu0 0
    %390 = vmatprep.subr.bf16.mxu0 0
    %391 = vmatpush1.bf16.msra.mxu0 0
    %392 = vmatprep.subr.bf16.mxu0 0
    %393 = vmatpush1.bf16.msra.mxu0 0
    %394 = vmatprep.subr.bf16.mxu0 0
    %395 = vmatpush1.bf16.msra.mxu0 0
    %396 = vmatprep.subr.bf16.mxu0 0
    %397 = vmatpush1.bf16.msra.mxu0 %v378
    %398 = vmatprep.subr.bf16.mxu0 0
    %399 = vmatpush1.bf16.msra.mxu0 %v377
    %400 = vmatprep.subr.bf16.mxu0 0
    %401 = vmatpush2.bf16.msra.mxu0 0
    %402 = vmatprep.subr.bf16.mxu0 0
    %403 = vmatpush2.bf16.msra.mxu0 0
    %404 = vmatprep.subr.bf16.mxu0 0
    %405 = vmatpush2.bf16.msra.mxu0 0
    %406 = vmatprep.subr.bf16.mxu0 0
    %407 = vmatpush2.bf16.msra.mxu0 0
    %408 = vmatprep.subr.bf16.mxu0 0
    %409 = vmatpush2.bf16.msra.mxu0 0
    %410 = vmatprep.subr.bf16.mxu0 0
    %411 = vmatpush2.bf16.msra.mxu0 0
    %412 = vmatprep.subr.bf16.mxu0 0
    %413 = vmatpush2.bf16.msra.mxu0 0
    %414 = vmatprep.subr.bf16.mxu0 0
    %415 = vmatpush2.bf16.msra.mxu0 0
    %416 = vmatprep.mubr.bf16.mxu0 0
    %417 = vmatmul.mubr.bf16.gmra.mxu0 %v382
    %v418 = vpop.f32.mrf.mxu0
    %v419 = vadd.f32 %v367, %v418
    %v420 = vpop.f32.mrf.mxu0
    %v421 = vpop.f32.mrf.mxu0
    %v422 = vpop.f32.mrf.mxu0
    %423 = vdwg.mxu0
    %v424 = vmax.f32 %v419, 0.0
    %v425 = vpack.c.bf16 %v424, %v424
    %v426 = vld [vmem:[%s9] sm:$0xf]
    %v427 = vld [vmem:[%s9 + $0x4] sm:$0xf]
    %v428 = vld [vmem:[%s9 + $0x8] sm:$0xf]
    %v429 = vld [vmem:[%s9 + $0xc] sm:$0xf]
    %v430 = vld [vmem:[%s10] sm:$0x1]
    %v432 = vlaneseq
    %v433 = vshrl.u32 %v432, 7
    %v434 = vsub.s32 0, %v433
    %v435 = vrot.slane %v430, %v434
    %v441 = vunpack.c.l.b16 %v426
    %v442 = vunpack.c.l.b16 %v427
    %v443 = vunpack.c.l.b16 %v428
    %v444 = vunpack.c.l.b16 %v429
    %v445 = vpack.c.b16 %v442, %v441
    %v446 = vpack.c.b16 %v444, %v443
    %v450 = vsel %vm176, %v425, 0
    %452 = vmatprep.subr.bf16.mxu0 0
    %453 = vmatpush1.bf16.msra.mxu0 0
    %454 = vmatprep.subr.bf16.mxu0 0
    %455 = vmatpush1.bf16.msra.mxu0 0
    %456 = vmatprep.subr.bf16.mxu0 0
    %457 = vmatpush1.bf16.msra.mxu0 0
    %458 = vmatprep.subr.bf16.mxu0 0
    %459 = vmatpush1.bf16.msra.mxu0 0
    %460 = vmatprep.subr.bf16.mxu0 0
    %461 = vmatpush1.bf16.msra.mxu0 0
    %462 = vmatprep.subr.bf16.mxu0 0
    %463 = vmatpush1.bf16.msra.mxu0 0
    %464 = vmatprep.subr.bf16.mxu0 0
    %465 = vmatpush1.bf16.msra.mxu0 %v446
    %466 = vmatprep.subr.bf16.mxu0 0
    %467 = vmatpush1.bf16.msra.mxu0 %v445
    %468 = vmatprep.subr.bf16.mxu0 0
    %469 = vmatpush2.bf16.msra.mxu0 0
    %470 = vmatprep.subr.bf16.mxu0 0
    %471 = vmatpush2.bf16.msra.mxu0 0
    %472 = vmatprep.subr.bf16.mxu0 0
    %473 = vmatpush2.bf16.msra.mxu0 0
    %474 = vmatprep.subr.bf16.mxu0 0
    %475 = vmatpush2.bf16.msra.mxu0 0
    %476 = vmatprep.subr.bf16.mxu0 0
    %477 = vmatpush2.bf16.msra.mxu0 0
    %478 = vmatprep.subr.bf16.mxu0 0
    %479 = vmatpush2.bf16.msra.mxu0 0
    %480 = vmatprep.subr.bf16.mxu0 0
    %481 = vmatpush2.bf16.msra.mxu0 0
    %482 = vmatprep.subr.bf16.mxu0 0
    %483 = vmatpush2.bf16.msra.mxu0 0
    %484 = vmatprep.mubr.bf16.mxu0 0
    %485 = vmatmul.mubr.bf16.gmra.mxu0 %v450
    %v486 = vpop.f32.mrf.mxu0
    %v487 = vadd.f32 %v435, %v486
    %v488 = vpop.f32.mrf.mxu0
    %v489 = vpop.f32.mrf.mxu0
    %v490 = vpop.f32.mrf.mxu0
    %491 = vdwg.mxu0
    %492 = vst [vmem:[%s11] sm:$0xff] %v487
    // Predicated region
    $region82: #{cdefunc_g_forward.1} parent=1 // pred_check
      _
    $region83: #{cdefunc_g_forward.1} parent=1 // pred_check_branch
      %494 = sbr.rel (0) target = $region85
    $region84: #{cdefunc_g_forward.1} parent=1 // pred_region
      _
    $region85: #{cdefunc_g_forward.1} parent=1 // pred_fallthru
      _
    // Predicated region
    $region86: #{cdefunc_g_forward.1} parent=1 // pred_check
      _
    $region87: #{cdefunc_g_forward.1} parent=1 // pred_check_branch
      %496 = sbr.rel (0) target = $region89
    $region88: #{cdefunc_g_forward.1} parent=1 // pred_region
      _
    $region89: #{cdefunc_g_forward.1} parent=1 // pred_fallthru
      _
    %497 = vsyncpa [#allocation3], 1
    %498 = vsyncpa [#allocation5], 1
    %499 = vsyncpa [#allocation8], 1
    %500 = vsyncpa [#allocation11], 1
    %501 = vsyncpa [#allocation14], 1

</llo_original>
